<compile_context>
chip_gen: v6e
topology: v6e:2x2x1
jax: 0.10.0
libtpu: 0.0.40
codegen_flags: <defaults>
</compile_context>

<pallas_src>
import functools

import jax
import jax.numpy as jnp
from jax.experimental import pallas as pl
from jax.experimental.pallas import tpu as pltpu


# ---------------------------------------------------------------------------
# Mask construction (faithful port of the PyTorch get_mask helper).
# ---------------------------------------------------------------------------
def get_mask(in_features, out_features, in_flow_features, mask_type=None):
    """mask_type: 'input' | None | 'output'. Returns (out_features, in_features)."""
    if mask_type == 'input':
        in_degrees = jnp.arange(in_features) % in_flow_features
    else:
        in_degrees = jnp.arange(in_features) % (in_flow_features - 1)
    if mask_type == 'output':
        out_degrees = jnp.arange(out_features) % in_flow_features - 1
    else:
        out_degrees = jnp.arange(out_features) % (in_flow_features - 1)
    return (out_degrees[:, None] >= in_degrees[None, :]).astype(jnp.float32)


_ACTS = {
    'relu': lambda v: jnp.maximum(v, 0.0),
    'tanh': jnp.tanh,
    'sigmoid': jax.nn.sigmoid,
}


# ---------------------------------------------------------------------------
# Pallas kernel: one batch-tile of the full direct forward (both branches,
# coupling and logdet fused).
# ---------------------------------------------------------------------------
def _made_split_kernel(x_ref,
                       wj_ref, bj_ref,                      # fused s/t joiner
                       ws1_ref, bs1_ref, ws2_ref, bs2_ref,  # s trunk
                       wt1_ref, bt1_ref, wt2_ref, bt2_ref,  # t trunk
                       u_ref, ld_ref, *, s_act, t_act, pre_exp_tanh):
    H = ws1_ref.shape[0]
    x = x_ref[...].astype(jnp.float32)                  # (TB, D)
    act_s = _ACTS[s_act]
    act_t = _ACTS[t_act]

    def mm(lhs, w_ref, b_ref):
        return (jnp.dot(lhs, w_ref[...], preferred_element_type=jnp.float32)
                + b_ref[...])                            # bias row broadcasts

    # ----- fused joiner: one (TB, D) @ (D, 2H) matmul -----------------------
    hj = mm(x, wj_ref, bj_ref)                           # (TB, 2H)
    hs = act_s(hj[:, :H])                                # s branch hidden
    ht = act_t(hj[:, H:])                                # t branch hidden

    # ----- s branch -> m ----------------------------------------------------
    hs = act_s(mm(hs, ws1_ref, bs1_ref))                 # (TB, H)
    m = mm(hs, ws2_ref, bs2_ref)                         # (TB, D)

    # ----- t branch -> a ----------------------------------------------------
    ht = act_t(mm(ht, wt1_ref, bt1_ref))                 # (TB, H)
    a = mm(ht, wt2_ref, bt2_ref)                         # (TB, D)

    if pre_exp_tanh:
        a = jnp.tanh(a)

    u_ref[...] = ((x - m) * jnp.exp(-a)).astype(u_ref.dtype)
    ld_ref[...] = (-jnp.sum(a, axis=-1, keepdims=True)).astype(ld_ref.dtype)


def _choose_tile_b(B):
    for t in (1024, 512, 256, 128, 64, 32, 16, 8):
        if B % t == 0:
            return t
    return B  # small / odd batch: single full-extent block is allowed


# ---------------------------------------------------------------------------
# Wrapper: parameter preprocessing + pallas_call.
# ---------------------------------------------------------------------------
def made_split_direct(x, params, *, s_act='tanh', t_act='relu',
                      pre_exp_tanh=False, tile_b=None):
    """MADESplit.forward(inputs, mode='direct'). Returns (u, logdet)."""
    B, D = x.shape
    H = params['wsj'].shape[0]
    f32 = jnp.float32

    im = params['input_mask']                            # (H, D)
    hm = params['hidden_mask']                           # (H, H)
    om = params['output_mask']                           # (D, H)

    # Fold the 0/1 autoregressive masks into the weights (exact) and transpose
    # to (in, out) so the kernel does plain x @ W on the MXU.  The two joiner
    # weights (shared input x) are fused into a single (D, 2H) matrix.
    wsj = (params['wsj'] * im).T.astype(f32)             # (D, H)
    wtj = (params['wtj'] * im).T.astype(f32)             # (D, H)
    wj = jnp.concatenate([wsj, wtj], axis=1)             # (D, 2H)
    bj = jnp.concatenate([params['bsj'], params['btj']]).reshape(1, 2 * H).astype(f32)

    ws1 = (params['ws1'] * hm).T.astype(f32)             # (H, H)
    ws2 = (params['ws2'] * om).T.astype(f32)             # (H, D)
    wt1 = (params['wt1'] * hm).T.astype(f32)
    wt2 = (params['wt2'] * om).T.astype(f32)

    bs1 = params['bs1'].reshape(1, H).astype(f32)
    bs2 = params['bs2'].reshape(1, D).astype(f32)
    bt1 = params['bt1'].reshape(1, H).astype(f32)
    bt2 = params['bt2'].reshape(1, D).astype(f32)

    if tile_b is None:
        tile_b = _choose_tile_b(B)
    grid = (pl.cdiv(B, tile_b),)

    kernel = functools.partial(_made_split_kernel, s_act=s_act, t_act=t_act,
                               pre_exp_tanh=pre_exp_tanh)

    const = lambda i: (0, 0)   # weights/biases: same block every step -> resident
    row = lambda i: (i, 0)     # batch-tiled arrays

    u, logdet = pl.pallas_call(
        kernel,
        out_shape=(
            jax.ShapeDtypeStruct((B, D), x.dtype),       # u in caller's dtype
            jax.ShapeDtypeStruct((B, 1), jnp.float32),   # logdet
        ),
        grid=grid,
        in_specs=[
            pl.BlockSpec((tile_b, D), row),                              # x
            pl.BlockSpec((D, 2 * H), const), pl.BlockSpec((1, 2 * H), const),  # fused joiner
            pl.BlockSpec((H, H), const), pl.BlockSpec((1, H), const),    # s_trunk[1]
            pl.BlockSpec((H, D), const), pl.BlockSpec((1, D), const),    # s_trunk[3]
            pl.BlockSpec((H, H), const), pl.BlockSpec((1, H), const),    # t_trunk[1]
            pl.BlockSpec((H, D), const), pl.BlockSpec((1, D), const),    # t_trunk[3]
        ],
        out_specs=(
            pl.BlockSpec((tile_b, D), row),
            pl.BlockSpec((tile_b, 1), row),
        ),
        compiler_params=pltpu.CompilerParams(
            dimension_semantics=("parallel",)),
    )(x, wj, bj, ws1, bs1, ws2, bs2, wt1, bt1, wt2, bt2)

    # TODO(synk): cond_inputs path (extra unmasked cond_linear added to each
    # joiner output) not wired up; pass None-equivalent only.
    # TODO(synk): mode='inverse' is an inherently sequential column-by-column
    # loop of D full forward passes; not implemented as a kernel.
    return u, logdet


# ---------------------------------------------------------------------------
# Parameter init + pure-JAX reference for correctness checking.
# ---------------------------------------------------------------------------
def init_made_split_params(key, num_inputs, num_hidden):
    D, H = num_inputs, num_hidden
    ks = jax.random.split(key, 6)

    def lin(k, fan_in, fan_out):
        bound = fan_in ** -0.5
        kw, kb = jax.random.split(k)
        w = jax.random.uniform(kw, (fan_out, fan_in), jnp.float32, -bound, bound)
        b = jax.random.uniform(kb, (fan_out,), jnp.float32, -bound, bound)
        return w, b

    wsj, bsj = lin(ks[0], D, H)
    ws1, bs1 = lin(ks[1], H, H)
    ws2, bs2 = lin(ks[2], H, D)
    wtj, btj = lin(ks[3], D, H)
    wt1, bt1 = lin(ks[4], H, H)
    wt2, bt2 = lin(ks[5], H, D)

    return dict(
        wsj=wsj, bsj=bsj, ws1=ws1, bs1=bs1, ws2=ws2, bs2=bs2,
        wtj=wtj, btj=btj, wt1=wt1, bt1=bt1, wt2=wt2, bt2=bt2,
        input_mask=get_mask(D, H, D, mask_type='input'),
        hidden_mask=get_mask(H, H, D),
        output_mask=get_mask(H, D, D, mask_type='output'),
    )


def _reference_direct(x, p, s_act='tanh', t_act='relu', pre_exp_tanh=False):
    act_s, act_t = _ACTS[s_act], _ACTS[t_act]

    def ml(v, w, b, mask):
        return v @ (w * mask).T + b

    h = ml(x, p['wsj'], p['bsj'], p['input_mask'])
    h = ml(act_s(h), p['ws1'], p['bs1'], p['hidden_mask'])
    m = ml(act_s(h), p['ws2'], p['bs2'], p['output_mask'])

    h = ml(x, p['wtj'], p['btj'], p['input_mask'])
    h = ml(act_t(h), p['wt1'], p['bt1'], p['hidden_mask'])
    a = ml(act_t(h), p['wt2'], p['bt2'], p['output_mask'])

    if pre_exp_tanh:
        a = jnp.tanh(a)
    u = (x - m) * jnp.exp(-a)
    return u, -jnp.sum(a, axis=-1, keepdims=True)


if __name__ == "__main__":
    key = jax.random.PRNGKey(0)
    kx, kp = jax.random.split(key)

    B, D, H = 16, 32, 64                 # batch=16, num_inputs=32, num_hidden=64
    x = jax.random.normal(kx, (B, D), dtype=jnp.float32)
    params = init_made_split_params(kp, D, H)

    u, logdet = made_split_direct(x, params, tile_b=8)   # grid=(2,) batch tiles
    jax.block_until_ready((u, logdet))

    u_ref, ld_ref = _reference_direct(x, params)
    assert u.shape == (B, D) and logdet.shape == (B, 1)
    assert jnp.allclose(u, u_ref, atol=1e-4, rtol=1e-4), "u mismatch"
    assert jnp.allclose(logdet, ld_ref, atol=1e-4, rtol=1e-4), "logdet mismatch"

    print("KERNEL_OK")
</pallas_src>

<mosaic_0001>
module attributes {stable_mosaic.version = 11 : i64} {
  func.func @_made_split_kernel(%arg0: i32, %arg1: memref<8x32xf32, #tpu.memory_space<vmem>>, %arg2: memref<32x128xf32, #tpu.memory_space<vmem>>, %arg3: memref<1x128xf32, #tpu.memory_space<vmem>>, %arg4: memref<64x64xf32, #tpu.memory_space<vmem>>, %arg5: memref<1x64xf32, #tpu.memory_space<vmem>>, %arg6: memref<64x32xf32, #tpu.memory_space<vmem>>, %arg7: memref<1x32xf32, #tpu.memory_space<vmem>>, %arg8: memref<64x64xf32, #tpu.memory_space<vmem>>, %arg9: memref<1x64xf32, #tpu.memory_space<vmem>>, %arg10: memref<64x32xf32, #tpu.memory_space<vmem>>, %arg11: memref<1x32xf32, #tpu.memory_space<vmem>>, %arg12: memref<8x32xf32, #tpu.memory_space<vmem>>, %arg13: memref<8x1xf32, #tpu.memory_space<vmem>>) attributes {dimension_semantics = [#tpu.dimension_semantics<parallel>], iteration_bounds = array<i64: 2>, scalar_prefetch = 0 : i64, scratch_operands = 0 : i64, tpu.core_type = #tpu.core_type<tc>, window_params = [{transform_indices = @transform_0, window_bounds = array<i64: 8, 32>}, {pipeline_mode = #tpu.pipeline_mode<synchronous>, transform_indices = @transform_1, window_bounds = array<i64: 32, 128>}, {pipeline_mode = #tpu.pipeline_mode<synchronous>, transform_indices = @transform_2, window_bounds = array<i64: 1, 128>}, {pipeline_mode = #tpu.pipeline_mode<synchronous>, transform_indices = @transform_3, window_bounds = array<i64: 64, 64>}, {pipeline_mode = #tpu.pipeline_mode<synchronous>, transform_indices = @transform_4, window_bounds = array<i64: 1, 64>}, {pipeline_mode = #tpu.pipeline_mode<synchronous>, transform_indices = @transform_5, window_bounds = array<i64: 64, 32>}, {pipeline_mode = #tpu.pipeline_mode<synchronous>, transform_indices = @transform_6, window_bounds = array<i64: 1, 32>}, {pipeline_mode = #tpu.pipeline_mode<synchronous>, transform_indices = @transform_7, window_bounds = array<i64: 64, 64>}, {pipeline_mode = #tpu.pipeline_mode<synchronous>, transform_indices = @transform_8, window_bounds = array<i64: 1, 64>}, {pipeline_mode = #tpu.pipeline_mode<synchronous>, transform_indices = @transform_9, window_bounds = array<i64: 64, 32>}, {pipeline_mode = #tpu.pipeline_mode<synchronous>, transform_indices = @transform_10, window_bounds = array<i64: 1, 32>}, {transform_indices = @transform_11, window_bounds = array<i64: 8, 32>}, {transform_indices = @transform_12, window_bounds = array<i64: 8, 1>}]} {
    %c0 = arith.constant 0 : index
    %c0_0 = arith.constant 0 : index
    %0 = vector.load %arg1[%c0, %c0_0] : memref<8x32xf32, #tpu.memory_space<vmem>>, vector<8x32xf32>
    %c0_1 = arith.constant 0 : index
    %c0_2 = arith.constant 0 : index
    %1 = vector.load %arg2[%c0_1, %c0_2] : memref<32x128xf32, #tpu.memory_space<vmem>>, vector<32x128xf32>
    %cst = arith.constant dense<0.000000e+00> : vector<8x128xf32>
    %2 = tpu.matmul %0, %1, %cst {dimension_numbers = #tpu.dot_dimension_numbers<[1], [0], [0], [1], [0, 0, 1, 1], [], []>} : vector<8x32xf32>, vector<32x128xf32>, vector<8x128xf32> -> vector<8x128xf32>
    %c0_3 = arith.constant 0 : index
    %c0_4 = arith.constant 0 : index
    %3 = vector.load %arg3[%c0_3, %c0_4] : memref<1x128xf32, #tpu.memory_space<vmem>>, vector<1x128xf32>
    %4 = vector.broadcast %3 : vector<1x128xf32> to vector<8x128xf32>
    %5 = arith.addf %2, %4 : vector<8x128xf32>
    %6 = vector.extract_strided_slice %5 {offsets = [0, 0], sizes = [8, 64], strides = [1, 1]} : vector<8x128xf32> to vector<8x64xf32>
    %7 = math.tanh %6 : vector<8x64xf32>
    %8 = vector.extract_strided_slice %5 {offsets = [0, 64], sizes = [8, 64], strides = [1, 1]} : vector<8x128xf32> to vector<8x64xf32>
    %cst_5 = arith.constant 0.000000e+00 : f32
    %9 = vector.broadcast %cst_5 : f32 to vector<8x64xf32>
    %10 = arith.maximumf %8, %9 : vector<8x64xf32>
    %c0_6 = arith.constant 0 : index
    %c0_7 = arith.constant 0 : index
    %11 = vector.load %arg4[%c0_6, %c0_7] : memref<64x64xf32, #tpu.memory_space<vmem>>, vector<64x64xf32>
    %cst_8 = arith.constant dense<0.000000e+00> : vector<8x64xf32>
    %12 = tpu.matmul %7, %11, %cst_8 {dimension_numbers = #tpu.dot_dimension_numbers<[1], [0], [0], [1], [0, 0, 1, 1], [], []>} : vector<8x64xf32>, vector<64x64xf32>, vector<8x64xf32> -> vector<8x64xf32>
    %c0_9 = arith.constant 0 : index
    %c0_10 = arith.constant 0 : index
    %13 = vector.load %arg5[%c0_9, %c0_10] : memref<1x64xf32, #tpu.memory_space<vmem>>, vector<1x64xf32>
    %14 = vector.broadcast %13 : vector<1x64xf32> to vector<8x64xf32>
    %15 = arith.addf %12, %14 : vector<8x64xf32>
    %16 = math.tanh %15 : vector<8x64xf32>
    %c0_11 = arith.constant 0 : index
    %c0_12 = arith.constant 0 : index
    %17 = vector.load %arg6[%c0_11, %c0_12] : memref<64x32xf32, #tpu.memory_space<vmem>>, vector<64x32xf32>
    %cst_13 = arith.constant dense<0.000000e+00> : vector<8x32xf32>
    %18 = tpu.matmul %16, %17, %cst_13 {dimension_numbers = #tpu.dot_dimension_numbers<[1], [0], [0], [1], [0, 0, 1, 1], [], []>} : vector<8x64xf32>, vector<64x32xf32>, vector<8x32xf32> -> vector<8x32xf32>
    %c0_14 = arith.constant 0 : index
    %c0_15 = arith.constant 0 : index
    %19 = vector.load %arg7[%c0_14, %c0_15] : memref<1x32xf32, #tpu.memory_space<vmem>>, vector<1x32xf32>
    %20 = vector.broadcast %19 : vector<1x32xf32> to vector<8x32xf32>
    %21 = arith.addf %18, %20 : vector<8x32xf32>
    %c0_16 = arith.constant 0 : index
    %c0_17 = arith.constant 0 : index
    %22 = vector.load %arg8[%c0_16, %c0_17] : memref<64x64xf32, #tpu.memory_space<vmem>>, vector<64x64xf32>
    %cst_18 = arith.constant dense<0.000000e+00> : vector<8x64xf32>
    %23 = tpu.matmul %10, %22, %cst_18 {dimension_numbers = #tpu.dot_dimension_numbers<[1], [0], [0], [1], [0, 0, 1, 1], [], []>} : vector<8x64xf32>, vector<64x64xf32>, vector<8x64xf32> -> vector<8x64xf32>
    %c0_19 = arith.constant 0 : index
    %c0_20 = arith.constant 0 : index
    %24 = vector.load %arg9[%c0_19, %c0_20] : memref<1x64xf32, #tpu.memory_space<vmem>>, vector<1x64xf32>
    %25 = vector.broadcast %24 : vector<1x64xf32> to vector<8x64xf32>
    %26 = arith.addf %23, %25 : vector<8x64xf32>
    %cst_21 = arith.constant 0.000000e+00 : f32
    %27 = vector.broadcast %cst_21 : f32 to vector<8x64xf32>
    %28 = arith.maximumf %26, %27 : vector<8x64xf32>
    %c0_22 = arith.constant 0 : index
    %c0_23 = arith.constant 0 : index
    %29 = vector.load %arg10[%c0_22, %c0_23] : memref<64x32xf32, #tpu.memory_space<vmem>>, vector<64x32xf32>
    %cst_24 = arith.constant dense<0.000000e+00> : vector<8x32xf32>
    %30 = tpu.matmul %28, %29, %cst_24 {dimension_numbers = #tpu.dot_dimension_numbers<[1], [0], [0], [1], [0, 0, 1, 1], [], []>} : vector<8x64xf32>, vector<64x32xf32>, vector<8x32xf32> -> vector<8x32xf32>
    %c0_25 = arith.constant 0 : index
    %c0_26 = arith.constant 0 : index
    %31 = vector.load %arg11[%c0_25, %c0_26] : memref<1x32xf32, #tpu.memory_space<vmem>>, vector<1x32xf32>
    %32 = vector.broadcast %31 : vector<1x32xf32> to vector<8x32xf32>
    %33 = arith.addf %30, %32 : vector<8x32xf32>
    %34 = arith.subf %0, %21 : vector<8x32xf32>
    %cst_27 = arith.constant 0.000000e+00 : f32
    %35 = vector.broadcast %cst_27 : f32 to vector<8x32xf32>
    %36 = arith.subf %35, %33 : vector<8x32xf32>
    %37 = math.exp %36 : vector<8x32xf32>
    %38 = arith.mulf %34, %37 : vector<8x32xf32>
    %c0_28 = arith.constant 0 : index
    %c0_29 = arith.constant 0 : index
    %39 = vector.load %arg12[%c0_28, %c0_29] : memref<8x32xf32, #tpu.memory_space<vmem>>, vector<8x32xf32>
    tpu.vector_store %arg12[%c0_28, %c0_29], %38 {strides = array<i32>} : memref<8x32xf32, #tpu.memory_space<vmem>>, vector<8x32xf32>,
    %cst_30 = arith.constant dense<0.000000e+00> : vector<8xf32>
    %40 = vector.multi_reduction <add>, %33, %cst_30 [1] : vector<8x32xf32> to vector<8xf32>
    %41 = vector.shape_cast %40 : vector<8xf32> to vector<8x1xf32>
    %cst_31 = arith.constant 0.000000e+00 : f32
    %42 = vector.broadcast %cst_31 : f32 to vector<8x1xf32>
    %43 = arith.subf %42, %41 : vector<8x1xf32>
    %c0_32 = arith.constant 0 : index
    %c0_33 = arith.constant 0 : index
    %44 = vector.load %arg13[%c0_32, %c0_33] : memref<8x1xf32, #tpu.memory_space<vmem>>, vector<8x1xf32>
    tpu.vector_store %arg13[%c0_32, %c0_33], %43 {strides = array<i32>} : memref<8x1xf32, #tpu.memory_space<vmem>>, vector<8x1xf32>,
    return
  }
  func.func @transform_0(%arg0: i32) -> (i32, i32) {
    %c0_i32 = arith.constant 0 : i32
    %c0_i32_0 = arith.constant 0 : i32
    return %arg0, %c0_i32 : i32, i32
  }
  func.func @transform_1(%arg0: i32) -> (i32, i32) {
    %c0_i32 = arith.constant 0 : i32
    %c0_i32_0 = arith.constant 0 : i32
    %c0_i32_1 = arith.constant 0 : i32
    return %c0_i32, %c0_i32_0 : i32, i32
  }
  func.func @transform_2(%arg0: i32) -> (i32, i32) {
    %c0_i32 = arith.constant 0 : i32
    %c0_i32_0 = arith.constant 0 : i32
    %c0_i32_1 = arith.constant 0 : i32
    return %c0_i32, %c0_i32_0 : i32, i32
  }
  func.func @transform_3(%arg0: i32) -> (i32, i32) {
    %c0_i32 = arith.constant 0 : i32
    %c0_i32_0 = arith.constant 0 : i32
    %c0_i32_1 = arith.constant 0 : i32
    return %c0_i32, %c0_i32_0 : i32, i32
  }
  func.func @transform_4(%arg0: i32) -> (i32, i32) {
    %c0_i32 = arith.constant 0 : i32
    %c0_i32_0 = arith.constant 0 : i32
    %c0_i32_1 = arith.constant 0 : i32
    return %c0_i32, %c0_i32_0 : i32, i32
  }
  func.func @transform_5(%arg0: i32) -> (i32, i32) {
    %c0_i32 = arith.constant 0 : i32
    %c0_i32_0 = arith.constant 0 : i32
    %c0_i32_1 = arith.constant 0 : i32
    return %c0_i32, %c0_i32_0 : i32, i32
  }
  func.func @transform_6(%arg0: i32) -> (i32, i32) {
    %c0_i32 = arith.constant 0 : i32
    %c0_i32_0 = arith.constant 0 : i32
    %c0_i32_1 = arith.constant 0 : i32
    return %c0_i32, %c0_i32_0 : i32, i32
  }
  func.func @transform_7(%arg0: i32) -> (i32, i32) {
    %c0_i32 = arith.constant 0 : i32
    %c0_i32_0 = arith.constant 0 : i32
    %c0_i32_1 = arith.constant 0 : i32
    return %c0_i32, %c0_i32_0 : i32, i32
  }
  func.func @transform_8(%arg0: i32) -> (i32, i32) {
    %c0_i32 = arith.constant 0 : i32
    %c0_i32_0 = arith.constant 0 : i32
    %c0_i32_1 = arith.constant 0 : i32
    return %c0_i32, %c0_i32_0 : i32, i32
  }
  func.func @transform_9(%arg0: i32) -> (i32, i32) {
    %c0_i32 = arith.constant 0 : i32
    %c0_i32_0 = arith.constant 0 : i32
    %c0_i32_1 = arith.constant 0 : i32
    return %c0_i32, %c0_i32_0 : i32, i32
  }
  func.func @transform_10(%arg0: i32) -> (i32, i32) {
    %c0_i32 = arith.constant 0 : i32
    %c0_i32_0 = arith.constant 0 : i32
    %c0_i32_1 = arith.constant 0 : i32
    return %c0_i32, %c0_i32_0 : i32, i32
  }
  func.func @transform_11(%arg0: i32) -> (i32, i32) {
    %c0_i32 = arith.constant 0 : i32
    %c0_i32_0 = arith.constant 0 : i32
    return %arg0, %c0_i32 : i32, i32
  }
  func.func @transform_12(%arg0: i32) -> (i32, i32) {
    %c0_i32 = arith.constant 0 : i32
    %c0_i32_0 = arith.constant 0 : i32
    return %arg0, %c0_i32 : i32, i32
  }
}

</mosaic_0001>

<llo_original>
// kernel: tpu_custom_call.1
$region0: #{tpu_custom_call.1}
  #allocation0 [shape = 'u32[]', space=smem, size = 0x4, offset = 0x4, fixed_abs, tag = 'smem constant byte address 0x4 - core index']
  #allocation1 [shape = 'u32[144,128]{1,0:T(1,128)}', space=vmem, size = 0x12000, scoped, tag = 'internal scratch']
  %s0 = inlined_call_operand.hbm [shape: f32[16,32], index: 0, kind: input, shape index: {}]
  %s1 = inlined_call_operand.vmem [shape: f32[32,128], index: 1, kind: input, shape index: {}]
  %s2 = inlined_call_operand.vmem [shape: f32[1,128], index: 2, kind: input, shape index: {}]
  %s3 = inlined_call_operand.vmem [shape: f32[64,64], index: 3, kind: input, shape index: {}]
  %s4 = inlined_call_operand.vmem [shape: f32[1,64], index: 4, kind: input, shape index: {}]
  %s5 = inlined_call_operand.vmem [shape: f32[64,32], index: 5, kind: input, shape index: {}]
  %s6 = inlined_call_operand.vmem [shape: f32[1,32], index: 6, kind: input, shape index: {}]
  %s7 = inlined_call_operand.vmem [shape: f32[64,64], index: 7, kind: input, shape index: {}]
  %s8 = inlined_call_operand.vmem [shape: f32[1,64], index: 8, kind: input, shape index: {}]
  %s9 = inlined_call_operand.vmem [shape: f32[64,32], index: 9, kind: input, shape index: {}]
  %s10 = inlined_call_operand.vmem [shape: f32[1,32], index: 10, kind: input, shape index: {}]
  %s11 = inlined_call_operand.hbm [shape: f32[16,32], index: 11, kind: output, shape index: {0}]
  %s12 = inlined_call_operand.vmem [shape: f32[16,1], index: 12, kind: output, shape index: {1}]
  %13 = xla_tuple %s11, %s12
  %s14 = sld [smem:[#allocation0]]
  $region89: #{tpu_custom_call.1} parent=0
    _
  %s16 = ssub.s32 1, %s14
  %s17 = scalar_select 0, %s16, %s14
  $region1: #{tpu_custom_call.1} parent=0
    #allocation2 [shape = 'u8[8192]{0}', space=vmem, size = 0x2000, scoped, tag = 'input window, operand 0']
    #allocation3 [shape = 's32[2]{0}', space=sflag, size = 0x8, scoped, tag = 'scoped memory for tpu_custom_call.1']
    #allocation4 [shape = 's32[2]{0}', space=sflag, size = 0x8, scoped, tag = 'scoped memory for tpu_custom_call.1']
    #allocation5 [shape = 'u8[8192]{0}', space=vmem, size = 0x2000, scoped, tag = 'output window, operand 0']
    %18 = vsyncpa [#allocation3], 0
    %s19 = scalar_lea.sflag [#allocation3], 1
    %20 = vsyncpa %s19, 0
    %21 = vsyncpa [#allocation4], 0
    %s22 = scalar_lea.sflag [#allocation4], 1
    %23 = vsyncpa %s22, 0
    loop: start=0, step=1, limit=4
    $region2: #{tpu_custom_call.1} parent=1 // loop_pre_header
      _
    $region3: #{tpu_custom_call.1} parent=1 // loop_header
      %s25 = sphi 0, %s29
      %p26 = scmp.ge.s32.totalorder %s25, 4
      %s35 = sphi 0, %s37
      %s38 = sphi 0, %s35
      %s39 = sphi 0, %s38
      %s55 = sphi 0, %s39
      %s59 = sphi 0, %s59
      %s61 = sphi 0, %s59
      %s62 = sphi 0, %s61
      %s76 = sphi 0, %s62
      %s80 = sphi 0, %s80
      %s82 = sphi 0, %s80
      %s83 = sphi 0, %s82
      %s97 = sphi 0, %s83
      %s101 = sphi 0, %s101
      %s103 = sphi 0, %s101
      %s104 = sphi 0, %s103
      %s118 = sphi 0, %s104
      %s122 = sphi 0, %s122
      %s124 = sphi 0, %s122
      %s125 = sphi 0, %s124
      %s139 = sphi 0, %s125
      %s143 = sphi 0, %s143
      %s145 = sphi 0, %s143
      %s146 = sphi 0, %s145
      %s160 = sphi 0, %s146
      %s164 = sphi 0, %s164
      %s166 = sphi 0, %s164
      %s167 = sphi 0, %s166
      %s181 = sphi 0, %s167
      %s185 = sphi 0, %s185
      %s187 = sphi 0, %s185
      %s188 = sphi 0, %s187
      %s202 = sphi 0, %s188
      %s206 = sphi 0, %s206
      %s208 = sphi 0, %s206
      %s209 = sphi 0, %s208
      %s223 = sphi 0, %s209
      %s227 = sphi 0, %s227
      %s229 = sphi 0, %s227
      %s230 = sphi 0, %s229
      %s244 = sphi 0, %s230
      %s248 = sphi 0, %s248
      %s250 = sphi 0, %s248
      %s251 = sphi 0, %s250
      %s265 = sphi 0, %s251
      %s271 = sphi 0, %s273
      %s274 = sphi 0, %s271
      %s275 = sphi 0, %s274
      %s291 = sphi 0, %s275
      %s297 = sphi 0, %s299
      %s300 = sphi 0, %s297
      %s301 = sphi 0, %s300
      %s317 = sphi 0, %s301
    $region4: #{tpu_custom_call.1} parent=1 // loop_header_branch
      %28 = sbr.rel (%p26) target = $region8
    $region5: #{tpu_custom_call.1} parent=1 // loop_body
      %s30 = ssub.s32 %s25, 1
      %s31 = ssub.s32 %s25, 2
      %s32 = sadd.s32 %s25, 1
      %s33 = ssub.s32 %s25, %s32
      %p34 = scmp.eq.s32.totalorder %s33, 0
      %s36 = sadd.s32 %s35, 1
      %s37 = scalar_select %p34, %s35, %s36
      %p40 = pneg %p34
      %p41 = scmp.eq.s32.totalorder %s25, 1
      %p42 = por %p40, %p41
      %p43 = scmp.ne.s32.totalorder %s35, %s38
      %p44 = scmp.eq.s32.totalorder %s25, 0
      %p45 = por %p43, %p44
      %p46 = scmp.ne.s32.totalorder %s35, %s38
      %p47 = scmp.eq.s32.totalorder %s30, 1
      %p48 = por %p46, %p47
      %p49 = scmp.ne.s32.totalorder %s38, %s39
      %p50 = scmp.eq.s32.totalorder %s30, 0
      %p51 = por %p49, %p50
      %p52 = scmp.ne.s32.totalorder %s38, %s39
      %p53 = scmp.eq.s32.totalorder %s31, 1
      %p54 = por %p52, %p53
      %p56 = scmp.ne.s32.totalorder %s39, %s55
      %p57 = scmp.eq.s32.totalorder %s31, 0
      %p58 = por %p56, %p57
      %s60 = sadd.s32 %s59, 1
      %p63 = scmp.eq.s32.totalorder %s25, 1
      %p64 = scmp.ne.s32.totalorder %s59, %s61
      %p65 = scmp.eq.s32.totalorder %s25, 0
      %p66 = por %p64, %p65
      %p67 = scmp.ne.s32.totalorder %s59, %s61
      %p68 = scmp.eq.s32.totalorder %s30, 1
      %p69 = por %p67, %p68
      %p70 = scmp.ne.s32.totalorder %s61, %s62
      %p71 = scmp.eq.s32.totalorder %s30, 0
      %p72 = por %p70, %p71
      %p73 = scmp.ne.s32.totalorder %s61, %s62
      %p74 = scmp.eq.s32.totalorder %s31, 1
      %p75 = por %p73, %p74
      %p77 = scmp.ne.s32.totalorder %s62, %s76
      %p78 = scmp.eq.s32.totalorder %s31, 0
      %p79 = por %p77, %p78
      %s81 = sadd.s32 %s80, 1
      %p84 = scmp.eq.s32.totalorder %s25, 1
      %p85 = scmp.ne.s32.totalorder %s80, %s82
      %p86 = scmp.eq.s32.totalorder %s25, 0
      %p87 = por %p85, %p86
      %p88 = scmp.ne.s32.totalorder %s80, %s82
      %p89 = scmp.eq.s32.totalorder %s30, 1
      %p90 = por %p88, %p89
      %p91 = scmp.ne.s32.totalorder %s82, %s83
      %p92 = scmp.eq.s32.totalorder %s30, 0
      %p93 = por %p91, %p92
      %p94 = scmp.ne.s32.totalorder %s82, %s83
      %p95 = scmp.eq.s32.totalorder %s31, 1
      %p96 = por %p94, %p95
      %p98 = scmp.ne.s32.totalorder %s83, %s97
      %p99 = scmp.eq.s32.totalorder %s31, 0
      %p100 = por %p98, %p99
      %s102 = sadd.s32 %s101, 1
      %p105 = scmp.eq.s32.totalorder %s25, 1
      %p106 = scmp.ne.s32.totalorder %s101, %s103
      %p107 = scmp.eq.s32.totalorder %s25, 0
      %p108 = por %p106, %p107
      %p109 = scmp.ne.s32.totalorder %s101, %s103
      %p110 = scmp.eq.s32.totalorder %s30, 1
      %p111 = por %p109, %p110
      %p112 = scmp.ne.s32.totalorder %s103, %s104
      %p113 = scmp.eq.s32.totalorder %s30, 0
      %p114 = por %p112, %p113
      %p115 = scmp.ne.s32.totalorder %s103, %s104
      %p116 = scmp.eq.s32.totalorder %s31, 1
      %p117 = por %p115, %p116
      %p119 = scmp.ne.s32.totalorder %s104, %s118
      %p120 = scmp.eq.s32.totalorder %s31, 0
      %p121 = por %p119, %p120
      %s123 = sadd.s32 %s122, 1
      %p126 = scmp.eq.s32.totalorder %s25, 1
      %p127 = scmp.ne.s32.totalorder %s122, %s124
      %p128 = scmp.eq.s32.totalorder %s25, 0
      %p129 = por %p127, %p128
      %p130 = scmp.ne.s32.totalorder %s122, %s124
      %p131 = scmp.eq.s32.totalorder %s30, 1
      %p132 = por %p130, %p131
      %p133 = scmp.ne.s32.totalorder %s124, %s125
      %p134 = scmp.eq.s32.totalorder %s30, 0
      %p135 = por %p133, %p134
      %p136 = scmp.ne.s32.totalorder %s124, %s125
      %p137 = scmp.eq.s32.totalorder %s31, 1
      %p138 = por %p136, %p137
      %p140 = scmp.ne.s32.totalorder %s125, %s139
      %p141 = scmp.eq.s32.totalorder %s31, 0
      %p142 = por %p140, %p141
      %s144 = sadd.s32 %s143, 1
      %p147 = scmp.eq.s32.totalorder %s25, 1
      %p148 = scmp.ne.s32.totalorder %s143, %s145
      %p149 = scmp.eq.s32.totalorder %s25, 0
      %p150 = por %p148, %p149
      %p151 = scmp.ne.s32.totalorder %s143, %s145
      %p152 = scmp.eq.s32.totalorder %s30, 1
      %p153 = por %p151, %p152
      %p154 = scmp.ne.s32.totalorder %s145, %s146
      %p155 = scmp.eq.s32.totalorder %s30, 0
      %p156 = por %p154, %p155
      %p157 = scmp.ne.s32.totalorder %s145, %s146
      %p158 = scmp.eq.s32.totalorder %s31, 1
      %p159 = por %p157, %p158
      %p161 = scmp.ne.s32.totalorder %s146, %s160
      %p162 = scmp.eq.s32.totalorder %s31, 0
      %p163 = por %p161, %p162
      %s165 = sadd.s32 %s164, 1
      %p168 = scmp.eq.s32.totalorder %s25, 1
      %p169 = scmp.ne.s32.totalorder %s164, %s166
      %p170 = scmp.eq.s32.totalorder %s25, 0
      %p171 = por %p169, %p170
      %p172 = scmp.ne.s32.totalorder %s164, %s166
      %p173 = scmp.eq.s32.totalorder %s30, 1
      %p174 = por %p172, %p173
      %p175 = scmp.ne.s32.totalorder %s166, %s167
      %p176 = scmp.eq.s32.totalorder %s30, 0
      %p177 = por %p175, %p176
      %p178 = scmp.ne.s32.totalorder %s166, %s167
      %p179 = scmp.eq.s32.totalorder %s31, 1
      %p180 = por %p178, %p179
      %p182 = scmp.ne.s32.totalorder %s167, %s181
      %p183 = scmp.eq.s32.totalorder %s31, 0
      %p184 = por %p182, %p183
      %s186 = sadd.s32 %s185, 1
      %p189 = scmp.eq.s32.totalorder %s25, 1
      %p190 = scmp.ne.s32.totalorder %s185, %s187
      %p191 = scmp.eq.s32.totalorder %s25, 0
      %p192 = por %p190, %p191
      %p193 = scmp.ne.s32.totalorder %s185, %s187
      %p194 = scmp.eq.s32.totalorder %s30, 1
      %p195 = por %p193, %p194
      %p196 = scmp.ne.s32.totalorder %s187, %s188
      %p197 = scmp.eq.s32.totalorder %s30, 0
      %p198 = por %p196, %p197
      %p199 = scmp.ne.s32.totalorder %s187, %s188
      %p200 = scmp.eq.s32.totalorder %s31, 1
      %p201 = por %p199, %p200
      %p203 = scmp.ne.s32.totalorder %s188, %s202
      %p204 = scmp.eq.s32.totalorder %s31, 0
      %p205 = por %p203, %p204
      %s207 = sadd.s32 %s206, 1
      %p210 = scmp.eq.s32.totalorder %s25, 1
      %p211 = scmp.ne.s32.totalorder %s206, %s208
      %p212 = scmp.eq.s32.totalorder %s25, 0
      %p213 = por %p211, %p212
      %p214 = scmp.ne.s32.totalorder %s206, %s208
      %p215 = scmp.eq.s32.totalorder %s30, 1
      %p216 = por %p214, %p215
      %p217 = scmp.ne.s32.totalorder %s208, %s209
      %p218 = scmp.eq.s32.totalorder %s30, 0
      %p219 = por %p217, %p218
      %p220 = scmp.ne.s32.totalorder %s208, %s209
      %p221 = scmp.eq.s32.totalorder %s31, 1
      %p222 = por %p220, %p221
      %p224 = scmp.ne.s32.totalorder %s209, %s223
      %p225 = scmp.eq.s32.totalorder %s31, 0
      %p226 = por %p224, %p225
      %s228 = sadd.s32 %s227, 1
      %p231 = scmp.eq.s32.totalorder %s25, 1
      %p232 = scmp.ne.s32.totalorder %s227, %s229
      %p233 = scmp.eq.s32.totalorder %s25, 0
      %p234 = por %p232, %p233
      %p235 = scmp.ne.s32.totalorder %s227, %s229
      %p236 = scmp.eq.s32.totalorder %s30, 1
      %p237 = por %p235, %p236
      %p238 = scmp.ne.s32.totalorder %s229, %s230
      %p239 = scmp.eq.s32.totalorder %s30, 0
      %p240 = por %p238, %p239
      %p241 = scmp.ne.s32.totalorder %s229, %s230
      %p242 = scmp.eq.s32.totalorder %s31, 1
      %p243 = por %p241, %p242
      %p245 = scmp.ne.s32.totalorder %s230, %s244
      %p246 = scmp.eq.s32.totalorder %s31, 0
      %p247 = por %p245, %p246
      %s249 = sadd.s32 %s248, 1
      %p252 = scmp.eq.s32.totalorder %s25, 1
      %p253 = scmp.ne.s32.totalorder %s248, %s250
      %p254 = scmp.eq.s32.totalorder %s25, 0
      %p255 = por %p253, %p254
      %p256 = scmp.ne.s32.totalorder %s248, %s250
      %p257 = scmp.eq.s32.totalorder %s30, 1
      %p258 = por %p256, %p257
      %p259 = scmp.ne.s32.totalorder %s250, %s251
      %p260 = scmp.eq.s32.totalorder %s30, 0
      %p261 = por %p259, %p260
      %p262 = scmp.ne.s32.totalorder %s250, %s251
      %p263 = scmp.eq.s32.totalorder %s31, 1
      %p264 = por %p262, %p263
      %p266 = scmp.ne.s32.totalorder %s251, %s265
      %p267 = scmp.eq.s32.totalorder %s31, 0
      %p268 = por %p266, %p267
      %s269 = ssub.s32 %s25, %s32
      %p270 = scmp.eq.s32.totalorder %s269, 0
      %s272 = sadd.s32 %s271, 1
      %s273 = scalar_select %p270, %s271, %s272
      %p276 = pneg %p270
      %p277 = scmp.eq.s32.totalorder %s25, 1
      %p278 = por %p276, %p277
      %p279 = scmp.ne.s32.totalorder %s271, %s274
      %p280 = scmp.eq.s32.totalorder %s25, 0
      %p281 = por %p279, %p280
      %p282 = scmp.ne.s32.totalorder %s271, %s274
      %p283 = scmp.eq.s32.totalorder %s30, 1
      %p284 = por %p282, %p283
      %p285 = scmp.ne.s32.totalorder %s274, %s275
      %p286 = scmp.eq.s32.totalorder %s30, 0
      %p287 = por %p285, %p286
      %p288 = scmp.ne.s32.totalorder %s274, %s275
      %p289 = scmp.eq.s32.totalorder %s31, 1
      %p290 = por %p288, %p289
      %p292 = scmp.ne.s32.totalorder %s275, %s291
      %p293 = scmp.eq.s32.totalorder %s31, 0
      %p294 = por %p292, %p293
      %s295 = ssub.s32 %s25, %s32
      %p296 = scmp.eq.s32.totalorder %s295, 0
      %s298 = sadd.s32 %s297, 1
      %s299 = scalar_select %p296, %s297, %s298
      %p302 = pneg %p296
      %p303 = scmp.eq.s32.totalorder %s25, 1
      %p304 = por %p302, %p303
      %p305 = scmp.ne.s32.totalorder %s297, %s300
      %p306 = scmp.eq.s32.totalorder %s25, 0
      %p307 = por %p305, %p306
      %p308 = scmp.ne.s32.totalorder %s297, %s300
      %p309 = scmp.eq.s32.totalorder %s30, 1
      %p310 = por %p308, %p309
      %p311 = scmp.ne.s32.totalorder %s300, %s301
      %p312 = scmp.eq.s32.totalorder %s30, 0
      %p313 = por %p311, %p312
      %p314 = scmp.ne.s32.totalorder %s300, %s301
      %p315 = scmp.eq.s32.totalorder %s31, 1
      %p316 = por %p314, %p315
      %p318 = scmp.ne.s32.totalorder %s301, %s317
      %p319 = scmp.eq.s32.totalorder %s31, 0
      %p320 = por %p318, %p319
      %p321 = scmp.le.s32.totalorder 1, %s25
      %p322 = scmp.lt.s32.totalorder %s25, 3
      %p323 = pnand %p321, %p322
      %p324 = pneg %p323
      // Predicated region
      $region9: #{tpu_custom_call.1} parent=5 // pred_check
        _
      $region10: #{tpu_custom_call.1} parent=5 // pred_check_branch
        %326 = sbr.rel (%p323) target = $region12
      $region11: #{tpu_custom_call.1} parent=5 // pred_region
        %s327 = ssub.s32 %s25, 1
        // Predicated region
        $region13: #{tpu_custom_call.1} parent=11 // pred_check
          %p328 = pneg %p72
        $region14: #{tpu_custom_call.1} parent=11 // pred_check_branch
          %330 = sbr.rel (%p328) target = $region16
        $region15: #{tpu_custom_call.1} parent=11 // pred_region
          _
        $region16: #{tpu_custom_call.1} parent=11 // pred_fallthru
          _
        // Predicated region
        $region17: #{tpu_custom_call.1} parent=11 // pred_check
          %p331 = pneg %p93
        $region18: #{tpu_custom_call.1} parent=11 // pred_check_branch
          %333 = sbr.rel (%p331) target = $region20
        $region19: #{tpu_custom_call.1} parent=11 // pred_region
          _
        $region20: #{tpu_custom_call.1} parent=11 // pred_fallthru
          _
        // Predicated region
        $region21: #{tpu_custom_call.1} parent=11 // pred_check
          %p334 = pneg %p114
        $region22: #{tpu_custom_call.1} parent=11 // pred_check_branch
          %336 = sbr.rel (%p334) target = $region24
        $region23: #{tpu_custom_call.1} parent=11 // pred_region
          _
        $region24: #{tpu_custom_call.1} parent=11 // pred_fallthru
          _
        // Predicated region
        $region25: #{tpu_custom_call.1} parent=11 // pred_check
          %p337 = pneg %p135
        $region26: #{tpu_custom_call.1} parent=11 // pred_check_branch
          %339 = sbr.rel (%p337) target = $region28
        $region27: #{tpu_custom_call.1} parent=11 // pred_region
          _
        $region28: #{tpu_custom_call.1} parent=11 // pred_fallthru
          _
        // Predicated region
        $region29: #{tpu_custom_call.1} parent=11 // pred_check
          %p340 = pneg %p156
        $region30: #{tpu_custom_call.1} parent=11 // pred_check_branch
          %342 = sbr.rel (%p340) target = $region32
        $region31: #{tpu_custom_call.1} parent=11 // pred_region
          _
        $region32: #{tpu_custom_call.1} parent=11 // pred_fallthru
          _
        // Predicated region
        $region33: #{tpu_custom_call.1} parent=11 // pred_check
          %p343 = pneg %p177
        $region34: #{tpu_custom_call.1} parent=11 // pred_check_branch
          %345 = sbr.rel (%p343) target = $region36
        $region35: #{tpu_custom_call.1} parent=11 // pred_region
          _
        $region36: #{tpu_custom_call.1} parent=11 // pred_fallthru
          _
        // Predicated region
        $region37: #{tpu_custom_call.1} parent=11 // pred_check
          %p346 = pneg %p198
        $region38: #{tpu_custom_call.1} parent=11 // pred_check_branch
          %348 = sbr.rel (%p346) target = $region40
        $region39: #{tpu_custom_call.1} parent=11 // pred_region
          _
        $region40: #{tpu_custom_call.1} parent=11 // pred_fallthru
          _
        // Predicated region
        $region41: #{tpu_custom_call.1} parent=11 // pred_check
          %p349 = pneg %p219
        $region42: #{tpu_custom_call.1} parent=11 // pred_check_branch
          %351 = sbr.rel (%p349) target = $region44
        $region43: #{tpu_custom_call.1} parent=11 // pred_region
          _
        $region44: #{tpu_custom_call.1} parent=11 // pred_fallthru
          _
        // Predicated region
        $region45: #{tpu_custom_call.1} parent=11 // pred_check
          %p352 = pneg %p240
        $region46: #{tpu_custom_call.1} parent=11 // pred_check_branch
          %354 = sbr.rel (%p352) target = $region48
        $region47: #{tpu_custom_call.1} parent=11 // pred_region
          _
        $region48: #{tpu_custom_call.1} parent=11 // pred_fallthru
          _
        // Predicated region
        $region49: #{tpu_custom_call.1} parent=11 // pred_check
          %p355 = pneg %p261
        $region50: #{tpu_custom_call.1} parent=11 // pred_check_branch
          %357 = sbr.rel (%p355) target = $region52
        $region51: #{tpu_custom_call.1} parent=11 // pred_region
          _
        $region52: #{tpu_custom_call.1} parent=11 // pred_fallthru
          _
      $region12: #{tpu_custom_call.1} parent=5 // pred_fallthru
        _
      %p358 = scmp.lt.s32.totalorder %s25, 2
      // Predicated region
      $region53: #{tpu_custom_call.1} parent=5 // pred_check
        %p359 = pneg %p358
      $region54: #{tpu_custom_call.1} parent=5 // pred_check_branch
        %361 = sbr.rel (%p359) target = $region56
      $region55: #{tpu_custom_call.1} parent=5 // pred_region
        // Predicated region
        $region57: #{tpu_custom_call.1} parent=55 // pred_check
          %p362 = pneg %p45
        $region58: #{tpu_custom_call.1} parent=55 // pred_check_branch
          %364 = sbr.rel (%p362) target = $region60
        $region59: #{tpu_custom_call.1} parent=55 // pred_region
          %s365 = sand.u32 %s35, 1
          %s366 = scalar_lea.sflag [#allocation3], %s365
          %s367 = sand.u32 %s35, 1
          %s368 = smul.addr %s367, 8
          %s369 = scalar_lea.vmem [#allocation2], %s368
          %s371 = ssub.s32 128, 128
          %372 = vsyncadd %s366, %s371
          %s373 = smul.addr %s25, 128
          %s374 = scalar_lea.hbm %s0, %s373
          %s376 = sshll.u32 %s369, 4
          %s377 = int_to_ptr.vmem [resolvable:$true] %s376
          %379 = dma.hbm_to_vmem [thread:$0]  %s374, 128, %s377, %s366
        $region60: #{tpu_custom_call.1} parent=55 // pred_fallthru
          _
      $region56: #{tpu_custom_call.1} parent=5 // pred_fallthru
        _
      %p380 = scmp.le.s32.totalorder 1, %s25
      %p381 = scmp.lt.s32.totalorder %s25, 3
      %p382 = pnand %p380, %p381
      %p383 = pneg %p382
      // Predicated region
      $region61: #{tpu_custom_call.1} parent=5 // pred_check
        _
      $region62: #{tpu_custom_call.1} parent=5 // pred_check_branch
        %385 = sbr.rel (%p382) target = $region64
      $region63: #{tpu_custom_call.1} parent=5 // pred_region
        %s386 = ssub.s32 %s25, 1
        %s387 = sand.u32 %s38, 1
        %s388 = scalar_lea.sflag [#allocation3], %s387
        %s389 = sand.u32 %s38, 1
        %s390 = smul.addr %s389, 8
        %s391 = scalar_lea.vmem [#allocation2], %s390
        // Predicated region
        $region65: #{tpu_custom_call.1} parent=63 // pred_check
          %p392 = pneg %p51
        $region66: #{tpu_custom_call.1} parent=63 // pred_check_branch
          %394 = sbr.rel (%p392) target = $region68
        $region67: #{tpu_custom_call.1} parent=63 // pred_region
          %395 = dma.done %s388, 128
        $region68: #{tpu_custom_call.1} parent=63 // pred_fallthru
          _
        %s396 = sand.u32 %s38, 1
        %s397 = scalar_lea.sflag [#allocation3], %s396
        %s398 = sand.u32 %s38, 1
        %s399 = smul.addr %s398, 8
        %s400 = scalar_lea.vmem [#allocation2], %s399
        %p401 = pneg %p51
        %p402 = pneg %p48
        %p403 = pneg %p72
        %p404 = pneg %p69
        %p405 = pneg %p93
        %p406 = pneg %p90
        %p407 = pneg %p114
        %p408 = pneg %p111
        %p409 = pneg %p135
        %p410 = pneg %p132
        %p411 = pneg %p156
        %p412 = pneg %p153
        %p413 = pneg %p177
        %p414 = pneg %p174
        %p415 = pneg %p198
        %p416 = pneg %p195
        %p417 = pneg %p219
        %p418 = pneg %p216
        %p419 = pneg %p240
        %p420 = pneg %p237
        %p421 = pneg %p261
        %p422 = pneg %p258
        %p423 = pneg %p287
        %p424 = pneg %p284
        %s425 = sand.u32 %s274, 1
        %s426 = scalar_lea.sflag [#allocation4], %s425
        %s427 = sand.u32 %s274, 1
        %s428 = smul.addr %s427, 8
        %s429 = scalar_lea.vmem [#allocation5], %s428
        %p430 = pneg %p313
        %p431 = pneg %p310
        %p432 = scmp.lt.s32.totalorder %s30, 1
        %s433 = scalar_select %p432, %s30, 1
        %s434 = smul.addr %s433, 8
        %s435 = scalar_lea.vmem %s12, %s434
        %p436 = scmp.lt.s32.totalorder %s30, 1
        %s437 = scalar_select %p436, %s30, 1
        %s438 = smul.addr %s437, 8
        %s439 = scalar_lea.vmem %s12, %s438
        %v440 = vld [vmem:[%s391] sm:$0xff]
        %v441 = vld [vmem:[%s1] sm:$0xff]
        %v442 = vld [vmem:[%s1 + $0x8] sm:$0xff]
        %v443 = vld [vmem:[%s1 + $0x10] sm:$0xff]
        %v444 = vld [vmem:[%s1 + $0x18] sm:$0xff]
        %v445 = vld [vmem:[%s2] sm:$0x1]
        %v447 = vlaneseq
        %v448 = vshrl.u32 %v447, 7
        %v449 = vsub.s32 0, %v448
        %v450 = vrot.slane %v445, %v449
        %vm452 = vcmask 261120
        %v454 = vsel %vm452, %v440, 0
        %456 = vmatprep.subr.mxu0 0.0
        %457 = vmatpush1.msra.mxu0 0.0
        %458 = vmatprep.subr.mxu0 0.0
        %459 = vmatpush1.msra.mxu0 0.0
        %460 = vmatprep.subr.mxu0 0.0
        %461 = vmatpush1.msra.mxu0 0.0
        %462 = vmatprep.subr.mxu0 0.0
        %463 = vmatpush1.msra.mxu0 0.0
        %464 = vmatprep.subr.mxu0 0.0
        %465 = vmatpush1.msra.mxu0 0.0
        %466 = vmatprep.subr.mxu0 0.0
        %467 = vmatpush1.msra.mxu0 0.0
        %468 = vmatprep.subr.mxu0 0.0
        %469 = vmatpush1.msra.mxu0 0.0
        %470 = vmatprep.subr.mxu0 0.0
        %471 = vmatpush1.msra.mxu0 0.0
        %472 = vmatprep.subr.mxu0 0.0
        %473 = vmatpush1.msra.mxu0 0.0
        %474 = vmatprep.subr.mxu0 0.0
        %475 = vmatpush1.msra.mxu0 0.0
        %476 = vmatprep.subr.mxu0 0.0
        %477 = vmatpush1.msra.mxu0 0.0
        %478 = vmatprep.subr.mxu0 0.0
        %479 = vmatpush1.msra.mxu0 0.0
        %480 = vmatprep.subr.mxu0 0.0
        %481 = vmatpush1.msra.mxu0 %v444
        %482 = vmatprep.subr.mxu0 0.0
        %483 = vmatpush1.msra.mxu0 %v443
        %484 = vmatprep.subr.mxu0 0.0
        %485 = vmatpush1.msra.mxu0 %v442
        %486 = vmatprep.subr.mxu0 0.0
        %487 = vmatpush1.msra.mxu0 %v441
        %488 = vmatprep.subr.mxu0 0.0
        %489 = vmatpush2.msra.mxu0 0.0
        %490 = vmatprep.subr.mxu0 0.0
        %491 = vmatpush2.msra.mxu0 0.0
        %492 = vmatprep.subr.mxu0 0.0
        %493 = vmatpush2.msra.mxu0 0.0
        %494 = vmatprep.subr.mxu0 0.0
        %495 = vmatpush2.msra.mxu0 0.0
        %496 = vmatprep.subr.mxu0 0.0
        %497 = vmatpush2.msra.mxu0 0.0
        %498 = vmatprep.subr.mxu0 0.0
        %499 = vmatpush2.msra.mxu0 0.0
        %500 = vmatprep.subr.mxu0 0.0
        %501 = vmatpush2.msra.mxu0 0.0
        %502 = vmatprep.subr.mxu0 0.0
        %503 = vmatpush2.msra.mxu0 0.0
        %504 = vmatprep.subr.mxu0 0.0
        %505 = vmatpush2.msra.mxu0 0.0
        %506 = vmatprep.subr.mxu0 0.0
        %507 = vmatpush2.msra.mxu0 0.0
        %508 = vmatprep.subr.mxu0 0.0
        %509 = vmatpush2.msra.mxu0 0.0
        %510 = vmatprep.subr.mxu0 0.0
        %511 = vmatpush2.msra.mxu0 0.0
        %512 = vmatprep.subr.mxu0 0.0
        %513 = vmatpush2.msra.mxu0 0.0
        %514 = vmatprep.subr.mxu0 0.0
        %515 = vmatpush2.msra.mxu0 0.0
        %516 = vmatprep.subr.mxu0 0.0
        %517 = vmatpush2.msra.mxu0 0.0
        %518 = vmatprep.subr.mxu0 0.0
        %519 = vmatpush2.msra.mxu0 0.0
        %520 = vmatprep.mubr.f32.mxu0 0.0
        %521 = vmatmul.mubr.f32.gmra.mxu0 %v454
        %v522 = vpop.f32.mrf.mxu0
        %v523 = vadd.f32 %v450, %v522
        %v524 = vpop.f32.mrf.mxu0
        %525 = vdwg.mxu0
        %v526 = vtanh.pop %v523
        %v527 = vmax.f32 %v523, 0.0
        %v528 = vld [vmem:[%s3] sm:$0xff]
        %v529 = vld [vmem:[%s3 + $0x8] sm:$0xff]
        %v530 = vld [vmem:[%s3 + $0x10] sm:$0xff]
        %v531 = vld [vmem:[%s3 + $0x18] sm:$0xff]
        %v532 = vld [vmem:[%s3 + $0x20] sm:$0xff]
        %v533 = vld [vmem:[%s3 + $0x28] sm:$0xff]
        %v534 = vld [vmem:[%s3 + $0x30] sm:$0xff]
        %v535 = vld [vmem:[%s3 + $0x38] sm:$0xff]
        %v536 = vld [vmem:[%s4] sm:$0x1]
        %v538 = vlaneseq
        %v539 = vshrl.u32 %v538, 7
        %v540 = vsub.s32 0, %v539
        %v541 = vrot.slane %v536, %v540
        %vm543 = vcmask 523264
        %v545 = vsel %vm543, %v526, 0
        %547 = vmatprep.subr.mxu0 0.0
        %548 = vmatpush1.msra.mxu0 0.0
        %549 = vmatprep.subr.mxu0 0.0
        %550 = vmatpush1.msra.mxu0 0.0
        %551 = vmatprep.subr.mxu0 0.0
        %552 = vmatpush1.msra.mxu0 0.0
        %553 = vmatprep.subr.mxu0 0.0
        %554 = vmatpush1.msra.mxu0 0.0
        %555 = vmatprep.subr.mxu0 0.0
        %556 = vmatpush1.msra.mxu0 0.0
        %557 = vmatprep.subr.mxu0 0.0
        %558 = vmatpush1.msra.mxu0 0.0
        %559 = vmatprep.subr.mxu0 0.0
        %560 = vmatpush1.msra.mxu0 0.0
        %561 = vmatprep.subr.mxu0 0.0
        %562 = vmatpush1.msra.mxu0 0.0
        %563 = vmatprep.subr.mxu0 0.0
        %564 = vmatpush1.msra.mxu0 %v535
        %565 = vmatprep.subr.mxu0 0.0
        %566 = vmatpush1.msra.mxu0 %v534
        %567 = vmatprep.subr.mxu0 0.0
        %568 = vmatpush1.msra.mxu0 %v533
        %569 = vmatprep.subr.mxu0 0.0
        %570 = vmatpush1.msra.mxu0 %v532
        %571 = vmatprep.subr.mxu0 0.0
        %572 = vmatpush1.msra.mxu0 %v531
        %573 = vmatprep.subr.mxu0 0.0
        %574 = vmatpush1.msra.mxu0 %v530
        %575 = vmatprep.subr.mxu0 0.0
        %576 = vmatpush1.msra.mxu0 %v529
        %577 = vmatprep.subr.mxu0 0.0
        %578 = vmatpush1.msra.mxu0 %v528
        %579 = vmatprep.subr.mxu0 0.0
        %580 = vmatpush2.msra.mxu0 0.0
        %581 = vmatprep.subr.mxu0 0.0
        %582 = vmatpush2.msra.mxu0 0.0
        %583 = vmatprep.subr.mxu0 0.0
        %584 = vmatpush2.msra.mxu0 0.0
        %585 = vmatprep.subr.mxu0 0.0
        %586 = vmatpush2.msra.mxu0 0.0
        %587 = vmatprep.subr.mxu0 0.0
        %588 = vmatpush2.msra.mxu0 0.0
        %589 = vmatprep.subr.mxu0 0.0
        %590 = vmatpush2.msra.mxu0 0.0
        %591 = vmatprep.subr.mxu0 0.0
        %592 = vmatpush2.msra.mxu0 0.0
        %593 = vmatprep.subr.mxu0 0.0
        %594 = vmatpush2.msra.mxu0 0.0
        %595 = vmatprep.subr.mxu0 0.0
        %596 = vmatpush2.msra.mxu0 0.0
        %597 = vmatprep.subr.mxu0 0.0
        %598 = vmatpush2.msra.mxu0 0.0
        %599 = vmatprep.subr.mxu0 0.0
        %600 = vmatpush2.msra.mxu0 0.0
        %601 = vmatprep.subr.mxu0 0.0
        %602 = vmatpush2.msra.mxu0 0.0
        %603 = vmatprep.subr.mxu0 0.0
        %604 = vmatpush2.msra.mxu0 0.0
        %605 = vmatprep.subr.mxu0 0.0
        %606 = vmatpush2.msra.mxu0 0.0
        %607 = vmatprep.subr.mxu0 0.0
        %608 = vmatpush2.msra.mxu0 0.0
        %609 = vmatprep.subr.mxu0 0.0
        %610 = vmatpush2.msra.mxu0 0.0
        %611 = vmatprep.mubr.f32.mxu0 0.0
        %612 = vmatmul.mubr.f32.gmra.mxu0 %v545
        %v613 = vpop.f32.mrf.mxu0
        %v614 = vadd.f32 %v541, %v613
        %v615 = vpop.f32.mrf.mxu0
        %616 = vdwg.mxu0
        %v617 = vtanh.pop %v614
        %v618 = vld [vmem:[%s5] sm:$0xff]
        %v619 = vld [vmem:[%s5 + $0x8] sm:$0xff]
        %v620 = vld [vmem:[%s5 + $0x10] sm:$0xff]
        %v621 = vld [vmem:[%s5 + $0x18] sm:$0xff]
        %v622 = vld [vmem:[%s5 + $0x20] sm:$0xff]
        %v623 = vld [vmem:[%s5 + $0x28] sm:$0xff]
        %v624 = vld [vmem:[%s5 + $0x30] sm:$0xff]
        %v625 = vld [vmem:[%s5 + $0x38] sm:$0xff]
        %v626 = vld [vmem:[%s6] sm:$0x1]
        %v628 = vlaneseq
        %v629 = vshrl.u32 %v628, 7
        %v630 = vsub.s32 0, %v629
        %v631 = vrot.slane %v626, %v630
        %v634 = vsel %vm543, %v617, 0
        %636 = vmatprep.subr.mxu0 0.0
        %637 = vmatpush1.msra.mxu0 0.0
        %638 = vmatprep.subr.mxu0 0.0
        %639 = vmatpush1.msra.mxu0 0.0
        %640 = vmatprep.subr.mxu0 0.0
        %641 = vmatpush1.msra.mxu0 0.0
        %642 = vmatprep.subr.mxu0 0.0
        %643 = vmatpush1.msra.mxu0 0.0
        %644 = vmatprep.subr.mxu0 0.0
        %645 = vmatpush1.msra.mxu0 0.0
        %646 = vmatprep.subr.mxu0 0.0
        %647 = vmatpush1.msra.mxu0 0.0
        %648 = vmatprep.subr.mxu0 0.0
        %649 = vmatpush1.msra.mxu0 0.0
        %650 = vmatprep.subr.mxu0 0.0
        %651 = vmatpush1.msra.mxu0 0.0
        %652 = vmatprep.subr.mxu0 0.0
        %653 = vmatpush1.msra.mxu0 %v625
        %654 = vmatprep.subr.mxu0 0.0
        %655 = vmatpush1.msra.mxu0 %v624
        %656 = vmatprep.subr.mxu0 0.0
        %657 = vmatpush1.msra.mxu0 %v623
        %658 = vmatprep.subr.mxu0 0.0
        %659 = vmatpush1.msra.mxu0 %v622
        %660 = vmatprep.subr.mxu0 0.0
        %661 = vmatpush1.msra.mxu0 %v621
        %662 = vmatprep.subr.mxu0 0.0
        %663 = vmatpush1.msra.mxu0 %v620
        %664 = vmatprep.subr.mxu0 0.0
        %665 = vmatpush1.msra.mxu0 %v619
        %666 = vmatprep.subr.mxu0 0.0
        %667 = vmatpush1.msra.mxu0 %v618
        %668 = vmatprep.subr.mxu0 0.0
        %669 = vmatpush2.msra.mxu0 0.0
        %670 = vmatprep.subr.mxu0 0.0
        %671 = vmatpush2.msra.mxu0 0.0
        %672 = vmatprep.subr.mxu0 0.0
        %673 = vmatpush2.msra.mxu0 0.0
        %674 = vmatprep.subr.mxu0 0.0
        %675 = vmatpush2.msra.mxu0 0.0
        %676 = vmatprep.subr.mxu0 0.0
        %677 = vmatpush2.msra.mxu0 0.0
        %678 = vmatprep.subr.mxu0 0.0
        %679 = vmatpush2.msra.mxu0 0.0
        %680 = vmatprep.subr.mxu0 0.0
        %681 = vmatpush2.msra.mxu0 0.0
        %682 = vmatprep.subr.mxu0 0.0
        %683 = vmatpush2.msra.mxu0 0.0
        %684 = vmatprep.subr.mxu0 0.0
        %685 = vmatpush2.msra.mxu0 0.0
        %686 = vmatprep.subr.mxu0 0.0
        %687 = vmatpush2.msra.mxu0 0.0
        %688 = vmatprep.subr.mxu0 0.0
        %689 = vmatpush2.msra.mxu0 0.0
        %690 = vmatprep.subr.mxu0 0.0
        %691 = vmatpush2.msra.mxu0 0.0
        %692 = vmatprep.subr.mxu0 0.0
        %693 = vmatpush2.msra.mxu0 0.0
        %694 = vmatprep.subr.mxu0 0.0
        %695 = vmatpush2.msra.mxu0 0.0
        %696 = vmatprep.subr.mxu0 0.0
        %697 = vmatpush2.msra.mxu0 0.0
        %698 = vmatprep.subr.mxu0 0.0
        %699 = vmatpush2.msra.mxu0 0.0
        %700 = vmatprep.mubr.f32.mxu0 0.0
        %701 = vmatmul.mubr.f32.gmra.mxu0 %v634
        %v702 = vpop.f32.mrf.mxu0
        %v703 = vadd.f32 %v631, %v702
        %v704 = vpop.f32.mrf.mxu0
        %705 = vdwg.mxu0
        %v706 = vld [vmem:[%s7] sm:$0xff]
        %v707 = vld [vmem:[%s7 + $0x8] sm:$0xff]
        %v708 = vld [vmem:[%s7 + $0x10] sm:$0xff]
        %v709 = vld [vmem:[%s7 + $0x18] sm:$0xff]
        %v710 = vld [vmem:[%s7 + $0x20] sm:$0xff]
        %v711 = vld [vmem:[%s7 + $0x28] sm:$0xff]
        %v712 = vld [vmem:[%s7 + $0x30] sm:$0xff]
        %v713 = vld [vmem:[%s7 + $0x38] sm:$0xff]
        %v714 = vld [vmem:[%s8] sm:$0x1]
        %v716 = vlaneseq
        %v717 = vshrl.u32 %v716, 7
        %v718 = vsub.s32 0, %v717
        %v719 = vrot.slane %v714, %v718
        %722 = vrot.lane.b32.xlu0 %v527, 64
        %v723 = vpop.permute.xlu0 %722
        %v724 = vsel %vm543, %v723, 0
        %726 = vmatprep.subr.mxu0 0.0
        %727 = vmatpush1.msra.mxu0 0.0
        %728 = vmatprep.subr.mxu0 0.0
        %729 = vmatpush1.msra.mxu0 0.0
        %730 = vmatprep.subr.mxu0 0.0
        %731 = vmatpush1.msra.mxu0 0.0
        %732 = vmatprep.subr.mxu0 0.0
        %733 = vmatpush1.msra.mxu0 0.0
        %734 = vmatprep.subr.mxu0 0.0
        %735 = vmatpush1.msra.mxu0 0.0
        %736 = vmatprep.subr.mxu0 0.0
        %737 = vmatpush1.msra.mxu0 0.0
        %738 = vmatprep.subr.mxu0 0.0
        %739 = vmatpush1.msra.mxu0 0.0
        %740 = vmatprep.subr.mxu0 0.0
        %741 = vmatpush1.msra.mxu0 0.0
        %742 = vmatprep.subr.mxu0 0.0
        %743 = vmatpush1.msra.mxu0 %v713
        %744 = vmatprep.subr.mxu0 0.0
        %745 = vmatpush1.msra.mxu0 %v712
        %746 = vmatprep.subr.mxu0 0.0
        %747 = vmatpush1.msra.mxu0 %v711
        %748 = vmatprep.subr.mxu0 0.0
        %749 = vmatpush1.msra.mxu0 %v710
        %750 = vmatprep.subr.mxu0 0.0
        %751 = vmatpush1.msra.mxu0 %v709
        %752 = vmatprep.subr.mxu0 0.0
        %753 = vmatpush1.msra.mxu0 %v708
        %754 = vmatprep.subr.mxu0 0.0
        %755 = vmatpush1.msra.mxu0 %v707
        %756 = vmatprep.subr.mxu0 0.0
        %757 = vmatpush1.msra.mxu0 %v706
        %758 = vmatprep.subr.mxu0 0.0
        %759 = vmatpush2.msra.mxu0 0.0
        %760 = vmatprep.subr.mxu0 0.0
        %761 = vmatpush2.msra.mxu0 0.0
        %762 = vmatprep.subr.mxu0 0.0
        %763 = vmatpush2.msra.mxu0 0.0
        %764 = vmatprep.subr.mxu0 0.0
        %765 = vmatpush2.msra.mxu0 0.0
        %766 = vmatprep.subr.mxu0 0.0
        %767 = vmatpush2.msra.mxu0 0.0
        %768 = vmatprep.subr.mxu0 0.0
        %769 = vmatpush2.msra.mxu0 0.0
        %770 = vmatprep.subr.mxu0 0.0
        %771 = vmatpush2.msra.mxu0 0.0
        %772 = vmatprep.subr.mxu0 0.0
        %773 = vmatpush2.msra.mxu0 0.0
        %774 = vmatprep.subr.mxu0 0.0
        %775 = vmatpush2.msra.mxu0 0.0
        %776 = vmatprep.subr.mxu0 0.0
        %777 = vmatpush2.msra.mxu0 0.0
        %778 = vmatprep.subr.mxu0 0.0
        %779 = vmatpush2.msra.mxu0 0.0
        %780 = vmatprep.subr.mxu0 0.0
        %781 = vmatpush2.msra.mxu0 0.0
        %782 = vmatprep.subr.mxu0 0.0
        %783 = vmatpush2.msra.mxu0 0.0
        %784 = vmatprep.subr.mxu0 0.0
        %785 = vmatpush2.msra.mxu0 0.0
        %786 = vmatprep.subr.mxu0 0.0
        %787 = vmatpush2.msra.mxu0 0.0
        %788 = vmatprep.subr.mxu0 0.0
        %789 = vmatpush2.msra.mxu0 0.0
        %790 = vmatprep.mubr.f32.mxu0 0.0
        %791 = vmatmul.mubr.f32.gmra.mxu0 %v724
        %v792 = vpop.f32.mrf.mxu0
        %v793 = vadd.f32 %v719, %v792
        %v794 = vpop.f32.mrf.mxu0
        %795 = vdwg.mxu0
        %v796 = vmax.f32 %v793, 0.0
        %v797 = vld [vmem:[%s9] sm:$0xff]
        %v798 = vld [vmem:[%s9 + $0x8] sm:$0xff]
        %v799 = vld [vmem:[%s9 + $0x10] sm:$0xff]
        %v800 = vld [vmem:[%s9 + $0x18] sm:$0xff]
        %v801 = vld [vmem:[%s9 + $0x20] sm:$0xff]
        %v802 = vld [vmem:[%s9 + $0x28] sm:$0xff]
        %v803 = vld [vmem:[%s9 + $0x30] sm:$0xff]
        %v804 = vld [vmem:[%s9 + $0x38] sm:$0xff]
        %v805 = vld [vmem:[%s10] sm:$0x1]
        %v807 = vlaneseq
        %v808 = vshrl.u32 %v807, 7
        %v809 = vsub.s32 0, %v808
        %v810 = vrot.slane %v805, %v809
        %v813 = vsel %vm543, %v796, 0
        %815 = vmatprep.subr.mxu0 0.0
        %816 = vmatpush1.msra.mxu0 0.0
        %817 = vmatprep.subr.mxu0 0.0
        %818 = vmatpush1.msra.mxu0 0.0
        %819 = vmatprep.subr.mxu0 0.0
        %820 = vmatpush1.msra.mxu0 0.0
        %821 = vmatprep.subr.mxu0 0.0
        %822 = vmatpush1.msra.mxu0 0.0
        %823 = vmatprep.subr.mxu0 0.0
        %824 = vmatpush1.msra.mxu0 0.0
        %825 = vmatprep.subr.mxu0 0.0
        %826 = vmatpush1.msra.mxu0 0.0
        %827 = vmatprep.subr.mxu0 0.0
        %828 = vmatpush1.msra.mxu0 0.0
        %829 = vmatprep.subr.mxu0 0.0
        %830 = vmatpush1.msra.mxu0 0.0
        %831 = vmatprep.subr.mxu0 0.0
        %832 = vmatpush1.msra.mxu0 %v804
        %833 = vmatprep.subr.mxu0 0.0
        %834 = vmatpush1.msra.mxu0 %v803
        %835 = vmatprep.subr.mxu0 0.0
        %836 = vmatpush1.msra.mxu0 %v802
        %837 = vmatprep.subr.mxu0 0.0
        %838 = vmatpush1.msra.mxu0 %v801
        %839 = vmatprep.subr.mxu0 0.0
        %840 = vmatpush1.msra.mxu0 %v800
        %841 = vmatprep.subr.mxu0 0.0
        %842 = vmatpush1.msra.mxu0 %v799
        %843 = vmatprep.subr.mxu0 0.0
        %844 = vmatpush1.msra.mxu0 %v798
        %845 = vmatprep.subr.mxu0 0.0
        %846 = vmatpush1.msra.mxu0 %v797
        %847 = vmatprep.subr.mxu0 0.0
        %848 = vmatpush2.msra.mxu0 0.0
        %849 = vmatprep.subr.mxu0 0.0
        %850 = vmatpush2.msra.mxu0 0.0
        %851 = vmatprep.subr.mxu0 0.0
        %852 = vmatpush2.msra.mxu0 0.0
        %853 = vmatprep.subr.mxu0 0.0
        %854 = vmatpush2.msra.mxu0 0.0
        %855 = vmatprep.subr.mxu0 0.0
        %856 = vmatpush2.msra.mxu0 0.0
        %857 = vmatprep.subr.mxu0 0.0
        %858 = vmatpush2.msra.mxu0 0.0
        %859 = vmatprep.subr.mxu0 0.0
        %860 = vmatpush2.msra.mxu0 0.0
        %861 = vmatprep.subr.mxu0 0.0
        %862 = vmatpush2.msra.mxu0 0.0
        %863 = vmatprep.subr.mxu0 0.0
        %864 = vmatpush2.msra.mxu0 0.0
        %865 = vmatprep.subr.mxu0 0.0
        %866 = vmatpush2.msra.mxu0 0.0
        %867 = vmatprep.subr.mxu0 0.0
        %868 = vmatpush2.msra.mxu0 0.0
        %869 = vmatprep.subr.mxu0 0.0
        %870 = vmatpush2.msra.mxu0 0.0
        %871 = vmatprep.subr.mxu0 0.0
        %872 = vmatpush2.msra.mxu0 0.0
        %873 = vmatprep.subr.mxu0 0.0
        %874 = vmatpush2.msra.mxu0 0.0
        %875 = vmatprep.subr.mxu0 0.0
        %876 = vmatpush2.msra.mxu0 0.0
        %877 = vmatprep.subr.mxu0 0.0
        %878 = vmatpush2.msra.mxu0 0.0
        %879 = vmatprep.mubr.f32.mxu0 0.0
        %880 = vmatmul.mubr.f32.gmra.mxu0 %v813
        %v881 = vpop.f32.mrf.mxu0
        %v882 = vadd.f32 %v810, %v881
        %v883 = vpop.f32.mrf.mxu0
        %884 = vdwg.mxu0
        %v885 = vsub.f32 %v440, %v703
        %v886 = vsub.f32 0.0, %v882
        %v887 = vmul.f32 %v886, 1.442695
        %v888 = vpow.pop %v887
        %v889 = vmul.f32 %v885, %v888
        %890 = vst.msk [vmem:[%s429] sm:$0xff] %vm452, %v889
        %v891 = vsel %vm452, %v882, 0.0
        %892 = vadd.xlane.f32.xlu0 %v891
        %v893 = vpop.xlane.xlu0 %892
        %v894 = vsub.f32 0.0, %v893
        %vm895 = vcmask 7168
        %896 = vst.msk [vmem:[%s439] sm:$0xff] %vm895, %v894
        %s897 = sand.u32 %s274, 1
        %s898 = scalar_lea.sflag [#allocation4], %s897
        %s899 = sand.u32 %s274, 1
        %s900 = smul.addr %s899, 8
        %s901 = scalar_lea.vmem [#allocation5], %s900
        %p902 = scmp.lt.s32.totalorder %s30, 1
        %s903 = scalar_select %p902, %s30, 1
        %s904 = smul.addr %s903, 8
        %s905 = scalar_lea.vmem %s12, %s904
        // Predicated region
        $region69: #{tpu_custom_call.1} parent=63 // pred_check
          %p906 = pneg %p284
        $region70: #{tpu_custom_call.1} parent=63 // pred_check_branch
          %908 = sbr.rel (%p906) target = $region72
        $region71: #{tpu_custom_call.1} parent=63 // pred_region
          %s910 = ssub.s32 128, 128
          %911 = vsyncadd %s898, %s910
          %s912 = smul.addr %s30, 128
          %s913 = scalar_lea.hbm %s11, %s912
          %s915 = sshll.u32 %s901, 4
          %s916 = int_to_ptr.vmem [resolvable:$true] %s915
          %918 = dma.vmem_to_hbm [thread:$0]  %s916, 128, %s913, %s898
        $region72: #{tpu_custom_call.1} parent=63 // pred_fallthru
          _
        // Predicated region
        $region73: #{tpu_custom_call.1} parent=63 // pred_check
          %p919 = pneg %p310
        $region74: #{tpu_custom_call.1} parent=63 // pred_check_branch
          %921 = sbr.rel (%p919) target = $region76
        $region75: #{tpu_custom_call.1} parent=63 // pred_region
          _
        $region76: #{tpu_custom_call.1} parent=63 // pred_fallthru
          _
      $region64: #{tpu_custom_call.1} parent=5 // pred_fallthru
        _
      %p922 = scmp.le.s32.totalorder 2, %s25
      // Predicated region
      $region77: #{tpu_custom_call.1} parent=5 // pred_check
        %p923 = pneg %p922
      $region78: #{tpu_custom_call.1} parent=5 // pred_check_branch
        %925 = sbr.rel (%p923) target = $region80
      $region79: #{tpu_custom_call.1} parent=5 // pred_region
        %s926 = ssub.s32 %s25, 2
        // Predicated region
        $region81: #{tpu_custom_call.1} parent=79 // pred_check
          %p927 = pneg %p290
        $region82: #{tpu_custom_call.1} parent=79 // pred_check_branch
          %929 = sbr.rel (%p927) target = $region84
        $region83: #{tpu_custom_call.1} parent=79 // pred_region
          %s930 = sand.u32 %s275, 1
          %s931 = scalar_lea.sflag [#allocation4], %s930
          %s932 = sand.u32 %s275, 1
          %s933 = smul.addr %s932, 8
          %s934 = scalar_lea.vmem [#allocation5], %s933
          %935 = dma.done %s931, 128
        $region84: #{tpu_custom_call.1} parent=79 // pred_fallthru
          _
        // Predicated region
        $region85: #{tpu_custom_call.1} parent=79 // pred_check
          %p936 = pneg %p316
        $region86: #{tpu_custom_call.1} parent=79 // pred_check_branch
          %938 = sbr.rel (%p936) target = $region88
        $region87: #{tpu_custom_call.1} parent=79 // pred_region
          %p939 = scmp.lt.s32.totalorder %s31, 1
          %s940 = scalar_select %p939, %s31, 1
          %s941 = smul.addr %s940, 8
          %s942 = scalar_lea.vmem %s12, %s941
        $region88: #{tpu_custom_call.1} parent=79 // pred_fallthru
          _
      $region80: #{tpu_custom_call.1} parent=5 // pred_fallthru
        _
    $region6: #{tpu_custom_call.1} parent=1 // loop_footer
      %s29 = sadd.s32 1, %s25
    $region7: #{tpu_custom_call.1} parent=1 // loop_footer_branch
      %24 = sbr.rel target = $region3
    $region8: #{tpu_custom_call.1} parent=1 // loop_exit
      _
    %943 = vsyncpa [#allocation3], 1
    %s944 = scalar_lea.sflag [#allocation3], 1
    %945 = vsyncpa %s944, 1
    %946 = vsyncpa [#allocation4], 1
    %s947 = scalar_lea.sflag [#allocation4], 1
    %948 = vsyncpa %s947, 1

</llo_original>
